<compile_context>
chip_gen: v6e
topology: v6e:2x2x1
jax: 0.10.0
libtpu: 0.0.40
codegen_flags: <defaults>
</compile_context>

<pallas_src>
import jax
import jax.numpy as jnp
from jax.experimental import pallas as pl
from jax.experimental.pallas import tpu as pltpu

_MiB = 1024 * 1024


# ---------------------------------------------------------------------------
# Pallas kernel: one (batch-block, spatial-tile) step of a 1x1 conv in NCHW
# ---------------------------------------------------------------------------
def _conv1x1_kernel(x_ref, w_ref, b_ref, o_ref):
    # x_ref: (bN, C_in, tP)   input tile, spatial positions on lanes
    # w_ref: (C_out, C_in)    resident weight (1x1 kernel squeezed)
    # b_ref: (C_out, 1)       resident bias
    # o_ref: (bN, C_out, tP)  output tile (lane-dense)
    w = w_ref[...]
    bias = b_ref[...]
    # Static unrolled loop over the (small) batch block: each image is a plain
    # (C_out,C_in)x(C_in,tP) matmul -> no layout transposes, lane-dense stores.
    for i in range(x_ref.shape[0]):
        y = jnp.dot(w, x_ref[i], preferred_element_type=jnp.float32)
        o_ref[i] = (y + bias).astype(o_ref.dtype)


# ---------------------------------------------------------------------------
# Tile-size selection helpers
# ---------------------------------------------------------------------------
def _vmem_limits():
    """Return (vmem_limit_bytes, tile_budget_bytes) for this chip generation."""
    try:
        cap = int(pltpu.get_tpu_info().vmem_capacity_bytes)
    except Exception:
        cap = 64 * _MiB  # conservative fallback (v7x physical VMEM)
    # v5e/v6e (128 MiB physical) -> 96 MiB limit; v7x (64 MiB) -> 48 MiB limit.
    vmem_limit = max(32 * _MiB, min((cap * 3) // 4, 96 * _MiB))
    # Leave headroom for weights/bias, semaphores and compiler scratch.
    tile_budget = (vmem_limit * 3) // 4
    return vmem_limit, tile_budget


def _largest_divisor_leq(n, cap):
    cap = max(1, min(n, cap))
    for d in range(cap, 0, -1):
        if n % d == 0:
            return d
    return 1


def _round_up(v, m):
    return ((v + m - 1) // m) * m


# ---------------------------------------------------------------------------
# Wrapper
# ---------------------------------------------------------------------------
def conv1x1_nchw(x, w, b):
    """1x1 Conv2d forward: x (N,C_in,H,W) -> (N,C_out,H,W)."""
    N, C_in, H, W = x.shape
    C_out = w.shape[0]
    HW = H * W
    out_dtype = x.dtype  # bf16 in -> bf16 out, f32 in -> f32 out (accum is f32)

    vmem_limit, tile_budget = _vmem_limits()
    x_item = jnp.dtype(x.dtype).itemsize
    o_item = jnp.dtype(out_dtype).itemsize
    # Double-buffered input + output tile bytes per (image, spatial column).
    col_bytes = 2 * (C_in * x_item + C_out * o_item)
    max_cols = max(128, tile_budget // col_bytes)

    if HW <= max_cols:
        # Whole spatial extent fits: block several images per step (capped so
        # the unrolled in-kernel loop stays short).
        tP = HW
        bN = _largest_divisor_leq(N, min(8, max_cols // HW))
    else:
        # Large spatial extent: one image per step, widest lane-dense tile
        # that fits the VMEM budget.
        tP = max(128, (max_cols // 128) * 128)
        bN = 1

    def _programs(bn, tp):
        return (N // bn) * pl.cdiv(HW, tp)

    # Guarantee >=4 grid programs where possible (v7x dual-TC + pipelining):
    # first shrink the batch block (free), then split the spatial tile.
    while _programs(bN, tP) < 4 and bN > 1:
        bN = _largest_divisor_leq(N, bN - 1)
    if _programs(bN, tP) < 4 and HW > 128:
        want_p = pl.cdiv(4, N // bN)
        tP = max(128, _round_up(pl.cdiv(HW, want_p), 128))

    grid = (N // bN, pl.cdiv(HW, tP))

    x3 = x.reshape(N, C_in, HW)  # free: contiguous view of NCHW
    w2 = w.reshape(C_out, C_in)
    b2 = b.reshape(C_out, 1)

    cost = pl.CostEstimate(
        flops=2 * N * C_out * C_in * HW,
        bytes_accessed=(N * C_in * HW * x_item
                        + N * C_out * HW * o_item
                        + C_out * C_in * jnp.dtype(w2.dtype).itemsize
                        + C_out * jnp.dtype(b2.dtype).itemsize),
        transcendentals=0,
    )

    out = pl.pallas_call(
        _conv1x1_kernel,
        out_shape=jax.ShapeDtypeStruct((N, C_out, HW), out_dtype),
        grid=grid,
        in_specs=[
            pl.BlockSpec((bN, C_in, tP), lambda n, p: (n, 0, p)),
            pl.BlockSpec((C_out, C_in), lambda n, p: (0, 0)),
            pl.BlockSpec((C_out, 1), lambda n, p: (0, 0)),
        ],
        out_specs=pl.BlockSpec((bN, C_out, tP), lambda n, p: (n, 0, p)),
        compiler_params=pltpu.CompilerParams(
            dimension_semantics=("parallel", "parallel"),
            vmem_limit_bytes=vmem_limit),
        cost_estimate=cost,
    )(x3, w2, b2)
    return out.reshape(N, C_out, H, W)


# ---------------------------------------------------------------------------
# Parameters / reference
# ---------------------------------------------------------------------------
def init_params(key, in_ch, out_ch):
    kw, kb = jax.random.split(key)
    w = 0.1 * jax.random.normal(kw, (out_ch, in_ch), jnp.float32)
    b = 0.1 * jax.random.normal(kb, (out_ch,), jnp.float32)
    return w, b


def ref_forward(x, w, b):
    y = jnp.einsum("oc,nchw->nohw", w, x,
                   precision=jax.lax.Precision.HIGHEST)
    return y + b[None, :, None, None]


# ---------------------------------------------------------------------------
if __name__ == "__main__":
    key = jax.random.PRNGKey(0)
    kx, kp = jax.random.split(key)

    N, in_ch, out_ch, H, W = 2, 8, 4, 16, 16
    x = jax.random.normal(kx, (N, in_ch, H, W), jnp.float32)
    w, b = init_params(kp, in_ch, out_ch)

    y = jax.jit(conv1x1_nchw)(x, w, b)
    y = jax.block_until_ready(y)
    assert y.shape == (N, out_ch, H, W), y.shape

    y_ref = ref_forward(x, w, b)
    if not bool(jnp.allclose(y, y_ref, atol=1e-4, rtol=1e-4)):
        raise AssertionError("Pallas output does not match JAX reference")

    print("KERNEL_OK")
</pallas_src>

<mosaic_0001>
module attributes {stable_mosaic.version = 11 : i64} {
  func.func @_conv1x1_kernel(%arg0: i32, %arg1: i32, %arg2: memref<1x8x128xf32, #tpu.memory_space<vmem>>, %arg3: memref<4x8xf32, #tpu.memory_space<vmem>>, %arg4: memref<4x1xf32, #tpu.memory_space<vmem>>, %arg5: memref<1x4x128xf32, #tpu.memory_space<vmem>>) attributes {dimension_semantics = [#tpu.dimension_semantics<parallel>, #tpu.dimension_semantics<parallel>], iteration_bounds = array<i64: 2, 2>, scalar_prefetch = 0 : i64, scratch_operands = 0 : i64, tpu.core_type = #tpu.core_type<tc>, window_params = [{transform_indices = @transform_0, window_bounds = array<i64: 1, 8, 128>}, {pipeline_mode = #tpu.pipeline_mode<synchronous>, transform_indices = @transform_1, window_bounds = array<i64: 4, 8>}, {pipeline_mode = #tpu.pipeline_mode<synchronous>, transform_indices = @transform_2, window_bounds = array<i64: 4, 1>}, {transform_indices = @transform_3, window_bounds = array<i64: 1, 4, 128>}]} {
    %c0 = arith.constant 0 : index
    %c0_0 = arith.constant 0 : index
    %0 = vector.load %arg3[%c0, %c0_0] : memref<4x8xf32, #tpu.memory_space<vmem>>, vector<4x8xf32>
    %c0_1 = arith.constant 0 : index
    %c0_2 = arith.constant 0 : index
    %1 = vector.load %arg4[%c0_1, %c0_2] : memref<4x1xf32, #tpu.memory_space<vmem>>, vector<4x1xf32>
    %c0_3 = arith.constant 0 : index
    %c0_4 = arith.constant 0 : index
    %c0_5 = arith.constant 0 : index
    %2 = vector.load %arg2[%c0_3, %c0_4, %c0_5] : memref<1x8x128xf32, #tpu.memory_space<vmem>>, vector<1x8x128xf32>
    %3 = vector.shape_cast %2 : vector<1x8x128xf32> to vector<8x128xf32>
    %cst = arith.constant dense<0.000000e+00> : vector<4x128xf32>
    %4 = tpu.matmul %0, %3, %cst {dimension_numbers = #tpu.dot_dimension_numbers<[1], [0], [0], [1], [0, 0, 1, 1], [], []>} : vector<4x8xf32>, vector<8x128xf32>, vector<4x128xf32> -> vector<4x128xf32>
    %5 = vector.broadcast %1 : vector<4x1xf32> to vector<4x128xf32>
    %6 = arith.addf %4, %5 : vector<4x128xf32>
    %c0_6 = arith.constant 0 : index
    %c0_7 = arith.constant 0 : index
    %c0_8 = arith.constant 0 : index
    %7 = vector.load %arg5[%c0_6, %c0_7, %c0_8] : memref<1x4x128xf32, #tpu.memory_space<vmem>>, vector<1x4x128xf32>
    %8 = vector.shape_cast %7 : vector<1x4x128xf32> to vector<4x128xf32>
    %9 = vector.shape_cast %6 : vector<4x128xf32> to vector<1x4x128xf32>
    tpu.vector_store %arg5[%c0_6, %c0_7, %c0_8], %9 {strides = array<i32>} : memref<1x4x128xf32, #tpu.memory_space<vmem>>, vector<1x4x128xf32>,
    return
  }
  func.func @transform_0(%arg0: i32, %arg1: i32) -> (i32, i32, i32) {
    %c0_i32 = arith.constant 0 : i32
    %c0_i32_0 = arith.constant 0 : i32
    return %arg0, %c0_i32, %arg1 : i32, i32, i32
  }
  func.func @transform_1(%arg0: i32, %arg1: i32) -> (i32, i32) {
    %c0_i32 = arith.constant 0 : i32
    %c0_i32_0 = arith.constant 0 : i32
    %c0_i32_1 = arith.constant 0 : i32
    return %c0_i32, %c0_i32_0 : i32, i32
  }
  func.func @transform_2(%arg0: i32, %arg1: i32) -> (i32, i32) {
    %c0_i32 = arith.constant 0 : i32
    %c0_i32_0 = arith.constant 0 : i32
    %c0_i32_1 = arith.constant 0 : i32
    return %c0_i32, %c0_i32_0 : i32, i32
  }
  func.func @transform_3(%arg0: i32, %arg1: i32) -> (i32, i32, i32) {
    %c0_i32 = arith.constant 0 : i32
    %c0_i32_0 = arith.constant 0 : i32
    return %arg0, %c0_i32, %arg1 : i32, i32, i32
  }
}

</mosaic_0001>

<llo_original>
// kernel: conv1x1_nchw.1
$region0: #{conv1x1_nchw.1}
  #allocation0 [shape = 'u32[]', space=smem, size = 0x4, offset = 0x4, fixed_abs, tag = 'smem constant byte address 0x4 - core index']
  #allocation1 [shape = 'u32[144,128]{1,0:T(1,128)}', space=vmem, size = 0x12000, scoped, tag = 'internal scratch']
  %s0 = inlined_call_operand.vmem [shape: f32[2,8,256], index: 0, kind: input, shape index: {}]
  %s1 = inlined_call_operand.vmem [shape: f32[4,8], index: 1, kind: input, shape index: {}]
  %s2 = inlined_call_operand.vmem [shape: f32[4,1], index: 2, kind: input, shape index: {}]
  %s3 = inlined_call_operand.vmem [shape: f32[2,4,256], index: 3, kind: output, shape index: {}]
  %s4 = sld [smem:[#allocation0]]
  $region45: #{conv1x1_nchw.1} parent=0
    _
  %s6 = ssub.s32 1, %s4
  %s7 = scalar_select 0, %s6, %s4
  loop: start=0, step=1, limit=6
  $region2: #{conv1x1_nchw.1} parent=0 // loop_pre_header
    _
  $region3: #{conv1x1_nchw.1} parent=0 // loop_header
    %s9 = sphi 0, %s13
    %p10 = scmp.ge.s32.totalorder %s9, 6
    %s16 = sphi 0, %s28
    %s17 = sphi 0, %s24
    %s18 = sphi 0, %s16
    %s19 = sphi 0, %s17
    %s20 = sphi 0, %s18
    %s21 = sphi 0, %s19
    %s33 = sphi 0, %s35
    %s36 = sphi 0, %s33
    %s37 = sphi 0, %s36
    %s53 = sphi 0, %s37
    %s57 = sphi 0, %s57
    %s59 = sphi 0, %s57
    %s60 = sphi 0, %s59
    %s74 = sphi 0, %s60
    %s78 = sphi 0, %s78
    %s80 = sphi 0, %s78
    %s81 = sphi 0, %s80
    %s95 = sphi 0, %s81
    %s103 = sphi 0, %s105
    %s106 = sphi 0, %s103
    %s107 = sphi 0, %s106
    %s123 = sphi 0, %s107
  $region4: #{conv1x1_nchw.1} parent=0 // loop_header_branch
    %12 = sbr.rel (%p10) target = $region8
  $region5: #{conv1x1_nchw.1} parent=0 // loop_body
    %s14 = ssub.s32 %s9, 1
    %s15 = ssub.s32 %s9, 2
    %s22 = sadd.s32 1, %s17
    %p23 = scmp.ge.s32.totalorder %s22, 2
    %s24 = scalar_select %p23, 0, %s22
    %s25 = sadd.s32 1, %s16
    %s26 = scalar_select %p23, %s25, %s16
    %p27 = scmp.ge.s32.totalorder %s26, 2
    %s28 = scalar_select %p27, 0, %s26
    %s29 = ssub.s32 %s16, %s28
    %s30 = ssub.s32 %s17, %s24
    %s31 = sor.u32 %s29, %s30
    %p32 = scmp.eq.s32.totalorder %s31, 0
    %s34 = sadd.s32 %s33, 1
    %s35 = scalar_select %p32, %s33, %s34
    %p38 = pneg %p32
    %p39 = scmp.eq.s32.totalorder %s9, 3
    %p40 = por %p38, %p39
    %p41 = scmp.ne.s32.totalorder %s33, %s36
    %p42 = scmp.eq.s32.totalorder %s9, 0
    %p43 = por %p41, %p42
    %p44 = scmp.ne.s32.totalorder %s33, %s36
    %p45 = scmp.eq.s32.totalorder %s14, 3
    %p46 = por %p44, %p45
    %p47 = scmp.ne.s32.totalorder %s36, %s37
    %p48 = scmp.eq.s32.totalorder %s14, 0
    %p49 = por %p47, %p48
    %p50 = scmp.ne.s32.totalorder %s36, %s37
    %p51 = scmp.eq.s32.totalorder %s15, 3
    %p52 = por %p50, %p51
    %p54 = scmp.ne.s32.totalorder %s37, %s53
    %p55 = scmp.eq.s32.totalorder %s15, 0
    %p56 = por %p54, %p55
    %s58 = sadd.s32 %s57, 1
    %p61 = scmp.eq.s32.totalorder %s9, 3
    %p62 = scmp.ne.s32.totalorder %s57, %s59
    %p63 = scmp.eq.s32.totalorder %s9, 0
    %p64 = por %p62, %p63
    %p65 = scmp.ne.s32.totalorder %s57, %s59
    %p66 = scmp.eq.s32.totalorder %s14, 3
    %p67 = por %p65, %p66
    %p68 = scmp.ne.s32.totalorder %s59, %s60
    %p69 = scmp.eq.s32.totalorder %s14, 0
    %p70 = por %p68, %p69
    %p71 = scmp.ne.s32.totalorder %s59, %s60
    %p72 = scmp.eq.s32.totalorder %s15, 3
    %p73 = por %p71, %p72
    %p75 = scmp.ne.s32.totalorder %s60, %s74
    %p76 = scmp.eq.s32.totalorder %s15, 0
    %p77 = por %p75, %p76
    %s79 = sadd.s32 %s78, 1
    %p82 = scmp.eq.s32.totalorder %s9, 3
    %p83 = scmp.ne.s32.totalorder %s78, %s80
    %p84 = scmp.eq.s32.totalorder %s9, 0
    %p85 = por %p83, %p84
    %p86 = scmp.ne.s32.totalorder %s78, %s80
    %p87 = scmp.eq.s32.totalorder %s14, 3
    %p88 = por %p86, %p87
    %p89 = scmp.ne.s32.totalorder %s80, %s81
    %p90 = scmp.eq.s32.totalorder %s14, 0
    %p91 = por %p89, %p90
    %p92 = scmp.ne.s32.totalorder %s80, %s81
    %p93 = scmp.eq.s32.totalorder %s15, 3
    %p94 = por %p92, %p93
    %p96 = scmp.ne.s32.totalorder %s81, %s95
    %p97 = scmp.eq.s32.totalorder %s15, 0
    %p98 = por %p96, %p97
    %s99 = ssub.s32 %s16, %s28
    %s100 = ssub.s32 %s17, %s24
    %s101 = sor.u32 %s99, %s100
    %p102 = scmp.eq.s32.totalorder %s101, 0
    %s104 = sadd.s32 %s103, 1
    %s105 = scalar_select %p102, %s103, %s104
    %p108 = pneg %p102
    %p109 = scmp.eq.s32.totalorder %s9, 3
    %p110 = por %p108, %p109
    %p111 = scmp.ne.s32.totalorder %s103, %s106
    %p112 = scmp.eq.s32.totalorder %s9, 0
    %p113 = por %p111, %p112
    %p114 = scmp.ne.s32.totalorder %s103, %s106
    %p115 = scmp.eq.s32.totalorder %s14, 3
    %p116 = por %p114, %p115
    %p117 = scmp.ne.s32.totalorder %s106, %s107
    %p118 = scmp.eq.s32.totalorder %s14, 0
    %p119 = por %p117, %p118
    %p120 = scmp.ne.s32.totalorder %s106, %s107
    %p121 = scmp.eq.s32.totalorder %s15, 3
    %p122 = por %p120, %p121
    %p124 = scmp.ne.s32.totalorder %s107, %s123
    %p125 = scmp.eq.s32.totalorder %s15, 0
    %p126 = por %p124, %p125
    %p127 = scmp.le.s32.totalorder 1, %s9
    %p128 = scmp.lt.s32.totalorder %s9, 5
    %p129 = pnand %p127, %p128
    %p130 = pneg %p129
    // Predicated region
    $region9: #{conv1x1_nchw.1} parent=5 // pred_check
      _
    $region10: #{conv1x1_nchw.1} parent=5 // pred_check_branch
      %132 = sbr.rel (%p129) target = $region12
    $region11: #{conv1x1_nchw.1} parent=5 // pred_region
      %s133 = ssub.s32 %s9, 1
      // Predicated region
      $region13: #{conv1x1_nchw.1} parent=11 // pred_check
        %p134 = pneg %p70
      $region14: #{conv1x1_nchw.1} parent=11 // pred_check_branch
        %136 = sbr.rel (%p134) target = $region16
      $region15: #{conv1x1_nchw.1} parent=11 // pred_region
        _
      $region16: #{conv1x1_nchw.1} parent=11 // pred_fallthru
        _
      // Predicated region
      $region17: #{conv1x1_nchw.1} parent=11 // pred_check
        %p137 = pneg %p91
      $region18: #{conv1x1_nchw.1} parent=11 // pred_check_branch
        %139 = sbr.rel (%p137) target = $region20
      $region19: #{conv1x1_nchw.1} parent=11 // pred_region
        _
      $region20: #{conv1x1_nchw.1} parent=11 // pred_fallthru
        _
    $region12: #{conv1x1_nchw.1} parent=5 // pred_fallthru
      _
    %p140 = scmp.lt.s32.totalorder %s9, 4
    // Predicated region
    $region21: #{conv1x1_nchw.1} parent=5 // pred_check
      %p141 = pneg %p140
    $region22: #{conv1x1_nchw.1} parent=5 // pred_check_branch
      %143 = sbr.rel (%p141) target = $region24
    $region23: #{conv1x1_nchw.1} parent=5 // pred_region
      // Predicated region
      $region25: #{conv1x1_nchw.1} parent=23 // pred_check
        %p144 = pneg %p43
      $region26: #{conv1x1_nchw.1} parent=23 // pred_check_branch
        %146 = sbr.rel (%p144) target = $region28
      $region27: #{conv1x1_nchw.1} parent=23 // pred_region
        %p147 = scmp.lt.s32.totalorder %s16, 1
        %s148 = scalar_select %p147, %s16, 1
        %p149 = scmp.lt.s32.totalorder %s17, 1
        %s150 = scalar_select %p149, %s17, 1
        %s151 = smul.addr %s148, 2
        %s152 = sadd.s32 %s150, %s151
        %s153 = smul.addr %s152, 8
        %s154 = scalar_lea.vmem %s0, %s153
      $region28: #{conv1x1_nchw.1} parent=23 // pred_fallthru
        _
    $region24: #{conv1x1_nchw.1} parent=5 // pred_fallthru
      _
    %p155 = scmp.le.s32.totalorder 1, %s9
    %p156 = scmp.lt.s32.totalorder %s9, 5
    %p157 = pnand %p155, %p156
    %p158 = pneg %p157
    // Predicated region
    $region29: #{conv1x1_nchw.1} parent=5 // pred_check
      _
    $region30: #{conv1x1_nchw.1} parent=5 // pred_check_branch
      %160 = sbr.rel (%p157) target = $region32
    $region31: #{conv1x1_nchw.1} parent=5 // pred_region
      %s161 = ssub.s32 %s9, 1
      %p162 = scmp.lt.s32.totalorder %s18, 1
      %s163 = scalar_select %p162, %s18, 1
      %p164 = scmp.lt.s32.totalorder %s19, 1
      %s165 = scalar_select %p164, %s19, 1
      %s166 = smul.addr %s163, 2
      %s167 = sadd.s32 %s165, %s166
      %s168 = smul.addr %s167, 8
      %s169 = scalar_lea.vmem %s0, %s168
      %p170 = pneg %p49
      %p171 = pneg %p46
      %p172 = pneg %p70
      %p173 = pneg %p67
      %p174 = pneg %p91
      %p175 = pneg %p88
      %p176 = pneg %p119
      %p177 = pneg %p116
      %p178 = scmp.lt.s32.totalorder %s18, 1
      %s179 = scalar_select %p178, %s18, 1
      %p180 = scmp.lt.s32.totalorder %s19, 1
      %s181 = scalar_select %p180, %s19, 1
      %s182 = smul.addr %s179, 2
      %s183 = sadd.s32 %s181, %s182
      %s184 = smul.addr %s183, 4
      %s185 = scalar_lea.vmem %s3, %s184
      %p186 = scmp.lt.s32.totalorder %s18, 1
      %s187 = scalar_select %p186, %s18, 1
      %p188 = scmp.lt.s32.totalorder %s19, 1
      %s189 = scalar_select %p188, %s19, 1
      %s190 = smul.addr %s187, 2
      %s191 = sadd.s32 %s189, %s190
      %s192 = smul.addr %s191, 8
      %s193 = scalar_lea.vmem %s0, %s192
      %p194 = scmp.lt.s32.totalorder %s18, 1
      %s195 = scalar_select %p194, %s18, 1
      %p196 = scmp.lt.s32.totalorder %s19, 1
      %s197 = scalar_select %p196, %s19, 1
      %s198 = smul.addr %s195, 2
      %s199 = sadd.s32 %s197, %s198
      %s200 = smul.addr %s199, 4
      %s201 = scalar_lea.vmem %s3, %s200
      %v202 = vld [vmem:[%s1] sm:$0xf]
      %v203 = vld [vmem:[%s2] sm:$0xf]
      %v204 = vld [vmem:[%s193] sm:$0xff]
      %206 = vset.pattern.permute.xlu0 0
      %207 = vperm.xlu0 %206, %v203
      %v208 = vpop.permute.xlu0 %207
      %vm210 = vcmask 64512
      %v212 = vsel %vm210, %v202, 0
      %214 = vmatprep.subr.mxu0 0.0
      %215 = vmatpush1.msra.mxu0 0.0
      %216 = vmatprep.subr.mxu0 0.0
      %217 = vmatpush1.msra.mxu0 0.0
      %218 = vmatprep.subr.mxu0 0.0
      %219 = vmatpush1.msra.mxu0 0.0
      %220 = vmatprep.subr.mxu0 0.0
      %221 = vmatpush1.msra.mxu0 0.0
      %222 = vmatprep.subr.mxu0 0.0
      %223 = vmatpush1.msra.mxu0 0.0
      %224 = vmatprep.subr.mxu0 0.0
      %225 = vmatpush1.msra.mxu0 0.0
      %226 = vmatprep.subr.mxu0 0.0
      %227 = vmatpush1.msra.mxu0 0.0
      %228 = vmatprep.subr.mxu0 0.0
      %229 = vmatpush1.msra.mxu0 0.0
      %230 = vmatprep.subr.mxu0 0.0
      %231 = vmatpush1.msra.mxu0 0.0
      %232 = vmatprep.subr.mxu0 0.0
      %233 = vmatpush1.msra.mxu0 0.0
      %234 = vmatprep.subr.mxu0 0.0
      %235 = vmatpush1.msra.mxu0 0.0
      %236 = vmatprep.subr.mxu0 0.0
      %237 = vmatpush1.msra.mxu0 0.0
      %238 = vmatprep.subr.mxu0 0.0
      %239 = vmatpush1.msra.mxu0 0.0
      %240 = vmatprep.subr.mxu0 0.0
      %241 = vmatpush1.msra.mxu0 0.0
      %242 = vmatprep.subr.mxu0 0.0
      %243 = vmatpush1.msra.mxu0 0.0
      %244 = vmatprep.subr.mxu0 0.0
      %245 = vmatpush1.msra.mxu0 %v204
      %246 = vmatprep.subr.mxu0 0.0
      %247 = vmatpush2.msra.mxu0 0.0
      %248 = vmatprep.subr.mxu0 0.0
      %249 = vmatpush2.msra.mxu0 0.0
      %250 = vmatprep.subr.mxu0 0.0
      %251 = vmatpush2.msra.mxu0 0.0
      %252 = vmatprep.subr.mxu0 0.0
      %253 = vmatpush2.msra.mxu0 0.0
      %254 = vmatprep.subr.mxu0 0.0
      %255 = vmatpush2.msra.mxu0 0.0
      %256 = vmatprep.subr.mxu0 0.0
      %257 = vmatpush2.msra.mxu0 0.0
      %258 = vmatprep.subr.mxu0 0.0
      %259 = vmatpush2.msra.mxu0 0.0
      %260 = vmatprep.subr.mxu0 0.0
      %261 = vmatpush2.msra.mxu0 0.0
      %262 = vmatprep.subr.mxu0 0.0
      %263 = vmatpush2.msra.mxu0 0.0
      %264 = vmatprep.subr.mxu0 0.0
      %265 = vmatpush2.msra.mxu0 0.0
      %266 = vmatprep.subr.mxu0 0.0
      %267 = vmatpush2.msra.mxu0 0.0
      %268 = vmatprep.subr.mxu0 0.0
      %269 = vmatpush2.msra.mxu0 0.0
      %270 = vmatprep.subr.mxu0 0.0
      %271 = vmatpush2.msra.mxu0 0.0
      %272 = vmatprep.subr.mxu0 0.0
      %273 = vmatpush2.msra.mxu0 0.0
      %274 = vmatprep.subr.mxu0 0.0
      %275 = vmatpush2.msra.mxu0 0.0
      %276 = vmatprep.subr.mxu0 0.0
      %277 = vmatpush2.msra.mxu0 0.0
      %278 = vmatprep.mubr.f32.mxu0 0.0
      %279 = vmatmul.mubr.f32.gmra.mxu0 %v212
      %v280 = vpop.f32.mrf.mxu0
      %v281 = vadd.f32 %v208, %v280
      %v282 = vpop.f32.mrf.mxu0
      %283 = vdwg.mxu0
      %284 = vst [vmem:[%s201] sm:$0xf] %v281
      %p285 = scmp.lt.s32.totalorder %s18, 1
      %s286 = scalar_select %p285, %s18, 1
      %p287 = scmp.lt.s32.totalorder %s19, 1
      %s288 = scalar_select %p287, %s19, 1
      %s289 = smul.addr %s286, 2
      %s290 = sadd.s32 %s288, %s289
      %s291 = smul.addr %s290, 4
      %s292 = scalar_lea.vmem %s3, %s291
      // Predicated region
      $region33: #{conv1x1_nchw.1} parent=31 // pred_check
        %p293 = pneg %p116
      $region34: #{conv1x1_nchw.1} parent=31 // pred_check_branch
        %295 = sbr.rel (%p293) target = $region36
      $region35: #{conv1x1_nchw.1} parent=31 // pred_region
        _
      $region36: #{conv1x1_nchw.1} parent=31 // pred_fallthru
        _
    $region32: #{conv1x1_nchw.1} parent=5 // pred_fallthru
      _
    %p296 = scmp.le.s32.totalorder 2, %s9
    // Predicated region
    $region37: #{conv1x1_nchw.1} parent=5 // pred_check
      %p297 = pneg %p296
    $region38: #{conv1x1_nchw.1} parent=5 // pred_check_branch
      %299 = sbr.rel (%p297) target = $region40
    $region39: #{conv1x1_nchw.1} parent=5 // pred_region
      %s300 = ssub.s32 %s9, 2
      // Predicated region
      $region41: #{conv1x1_nchw.1} parent=39 // pred_check
        %p301 = pneg %p122
      $region42: #{conv1x1_nchw.1} parent=39 // pred_check_branch
        %303 = sbr.rel (%p301) target = $region44
      $region43: #{conv1x1_nchw.1} parent=39 // pred_region
        %p304 = scmp.lt.s32.totalorder %s20, 1
        %s305 = scalar_select %p304, %s20, 1
        %p306 = scmp.lt.s32.totalorder %s21, 1
        %s307 = scalar_select %p306, %s21, 1
        %s308 = smul.addr %s305, 2
        %s309 = sadd.s32 %s307, %s308
        %s310 = smul.addr %s309, 4
        %s311 = scalar_lea.vmem %s3, %s310
      $region44: #{conv1x1_nchw.1} parent=39 // pred_fallthru
        _
    $region40: #{conv1x1_nchw.1} parent=5 // pred_fallthru
      _
  $region6: #{conv1x1_nchw.1} parent=0 // loop_footer
    %s13 = sadd.s32 1, %s9
  $region7: #{conv1x1_nchw.1} parent=0 // loop_footer_branch
    %8 = sbr.rel target = $region3
  $region8: #{conv1x1_nchw.1} parent=0 // loop_exit
    _

</llo_original>
